<compile_context>
chip_gen: v7x
topology: tpu7x:2x2x1
jax: 0.10.0
libtpu: 0.0.40
codegen_flags: <defaults>
</compile_context>

<pallas_src>
import jax
import jax.numpy as jnp
from jax.experimental import pallas as pl
from jax.experimental.pallas import tpu as pltpu


def _copy_kernel(x_ref, o_ref):
    # Straight copy of the current VMEM tile (lane-dense, unmasked stores).
    o_ref[...] = x_ref[...]


_MAX_LANE = 8192                        # widest lane dim we bother searching
_TARGET_BLOCK_BYTES = 2 * 1024 * 1024   # ~2 MiB/block: >=85% HBM roofline,
                                        # double-buffered in/out tiles still fit
                                        # the 16 MiB v5e scoped-VMEM default.
_SMALL_BYTES = 4 * 1024 * 1024          # below this: single block, no grid.


def _pick_lane_width(total):
    """Widest multiple of 128 dividing `total`; prefer >= 8 resulting rows."""
    if total % 128 != 0:
        return None
    best_any = None
    for d in range(_MAX_LANE // 128, 0, -1):
        lane = 128 * d
        if total % lane == 0:
            if best_any is None:
                best_any = lane
            if total // lane >= 8:      # keep sublanes full too
                return lane
    return best_any


def identity_pallas(x):
    """Identity forward pass: returns x unchanged (bit-exact, any rank/dtype)."""
    orig_shape = x.shape
    orig_dtype = x.dtype
    total = int(x.size)

    if total == 0:
        return x  # nothing to copy

    itemsize = jnp.dtype(orig_dtype).itemsize
    size_bytes = total * itemsize
    lane = _pick_lane_width(total)

    if lane is None:
        # Element count not a multiple of 128: single whole-array block
        # (block_shape == full array dims is always legal).  Identity inputs
        # from a conv backbone are effectively always 128-divisible, so this
        # path only sees small odd shapes.
        rows, lane = 1, total
    else:
        rows = total // lane

    x2d = x.reshape(rows, lane)
    cost = pl.CostEstimate(flops=0, transcendentals=0,
                           bytes_accessed=2 * size_bytes)

    if size_bytes <= _SMALL_BYTES or lane is None or rows < 8:
        # Grid-less single block: whole array lives in VMEM for one copy.
        out = pl.pallas_call(
            _copy_kernel,
            out_shape=jax.ShapeDtypeStruct((rows, lane), orig_dtype),
            input_output_aliases={0: 0},
            cost_estimate=cost,
        )(x2d)
        return out.reshape(orig_shape)

    # Tiled path: ~2 MiB, sublane-aligned tiles; partial last tile is fine
    # (tile dims are multiples of (8, 128)).
    tile_rows = _TARGET_BLOCK_BYTES // (lane * itemsize)
    tile_rows = max(8, (tile_rows // 8) * 8)
    tile_rows = min(tile_rows, rows)
    grid = (pl.cdiv(rows, tile_rows),)

    out = pl.pallas_call(
        _copy_kernel,
        out_shape=jax.ShapeDtypeStruct((rows, lane), orig_dtype),
        grid=grid,
        in_specs=[pl.BlockSpec((tile_rows, lane), lambda i: (i, 0))],
        out_specs=pl.BlockSpec((tile_rows, lane), lambda i: (i, 0)),
        input_output_aliases={0: 0},  # reuse the input HBM buffer for output
        compiler_params=pltpu.CompilerParams(
            dimension_semantics=("parallel",),  # shard steps across TCs (v7x)
        ),
        cost_estimate=cost,
    )(x2d)

    return out.reshape(orig_shape)


if __name__ == "__main__":
    key = jax.random.PRNGKey(0)
    # NCHW input consistent with a conv-backbone feature map.
    x = jax.random.normal(key, (2, 4, 16, 16), dtype=jnp.float32)

    y = identity_pallas(x)
    y = jax.block_until_ready(y)

    assert y.shape == x.shape and y.dtype == x.dtype
    assert bool(jnp.all(y == x))
    print("KERNEL_OK")
</pallas_src>

<mosaic_0001>
module attributes {stable_mosaic.version = 11 : i64} {
  func.func @_copy_kernel(%arg0: memref<8x256xf32, #tpu.memory_space<vmem>>, %arg1: memref<8x256xf32, #tpu.memory_space<vmem>>) attributes {dimension_semantics = [], scalar_prefetch = 0 : i64, scratch_operands = 0 : i64, tpu.core_type = #tpu.core_type<tc>} {
    %c0 = arith.constant 0 : index
    %c0_0 = arith.constant 0 : index
    %0 = vector.load %arg0[%c0, %c0_0] : memref<8x256xf32, #tpu.memory_space<vmem>>, vector<8x256xf32>
    %c0_1 = arith.constant 0 : index
    %c0_2 = arith.constant 0 : index
    %1 = vector.load %arg1[%c0_1, %c0_2] : memref<8x256xf32, #tpu.memory_space<vmem>>, vector<8x256xf32>
    tpu.vector_store %arg1[%c0_1, %c0_2], %0 {strides = array<i32>} : memref<8x256xf32, #tpu.memory_space<vmem>>, vector<8x256xf32>,
    return
  }
}

</mosaic_0001>

<llo_original>
// kernel: tpu_custom_call.1
$region0: #{tpu_custom_call.1}
  #allocation0 [shape = 'u32[]', space=smem, size = 0x4, offset = 0x4, fixed_abs, tag = 'smem constant byte address 0x4 - core index']
  #allocation1 [shape = 'u32[144,128]{1,0:T(1,128)}', space=vmem, size = 0x12000, scoped, tag = 'internal scratch']
  %s0 = inlined_call_operand.hbm [shape: f32[8,256], index: 0, kind: input, shape index: {}, may-alias: {0,1}]
  %s1 = inlined_call_operand.hbm [shape: f32[8,256], index: 1, kind: output, shape index: {}, may-alias: {0,1}]
  %s2 = sld [smem:[#allocation0]]
  $region18: #{tpu_custom_call.1} parent=0
    _
  %s4 = ssub.s32 1, %s2
  %s5 = scalar_select 0, %s4, %s2
  $region1: #{tpu_custom_call.1} parent=0
    #allocation2 [shape = 'u8[8192]{0}', space=vmem, size = 0x2000, scoped, tag = 'input window, operand 0, single buffered']
    #allocation3 [shape = 's32[1]{0}', space=sflag, size = 0x4, scoped, tag = 'scoped memory for tpu_custom_call.1']
    #allocation4 [shape = 's32[1]{0}', space=sflag, size = 0x4, scoped, tag = 'scoped memory for tpu_custom_call.1']
    #allocation5 [shape = 'u8[8192]{0}', space=vmem, size = 0x2000, scoped, tag = 'output window, operand 0, single buffered']
    %6 = vsyncpa [#allocation3], 0
    %7 = vsyncpa [#allocation4], 0
    // Predicated region
    $region2: #{tpu_custom_call.1} parent=1 // pred_check
      _
    $region3: #{tpu_custom_call.1} parent=1 // pred_check_branch
      %9 = sbr.rel (0) target = $region5
    $region4: #{tpu_custom_call.1} parent=1 // pred_region
      %s11 = ssub.s32 256, 256
      %12 = vsyncadd [#allocation3], %s11
      %s14 = sshll.u32 [#allocation2], 4
      %s15 = int_to_ptr.vmem [resolvable:$true] %s14
      %17 = dma.hbm_to_vmem [thread:$0]  %s0, 256, %s15, [#allocation3]
    $region5: #{tpu_custom_call.1} parent=1 // pred_fallthru
      _
    // Predicated region
    $region6: #{tpu_custom_call.1} parent=1 // pred_check
      _
    $region7: #{tpu_custom_call.1} parent=1 // pred_check_branch
      %19 = sbr.rel (0) target = $region9
    $region8: #{tpu_custom_call.1} parent=1 // pred_region
      %20 = dma.done [#allocation3], 256
    $region9: #{tpu_custom_call.1} parent=1 // pred_fallthru
      _
    %v21 = vld [vmem:[#allocation2] sm:$0xff]
    %v22 = vld [vmem:[#allocation2 + $0x8] sm:$0xff]
    %23 = vst [vmem:[#allocation5] sm:$0xff] %v21
    %24 = vst [vmem:[#allocation5 + $0x8] sm:$0xff] %v22
    // Predicated region
    $region10: #{tpu_custom_call.1} parent=1 // pred_check
      _
    $region11: #{tpu_custom_call.1} parent=1 // pred_check_branch
      %26 = sbr.rel (0) target = $region13
    $region12: #{tpu_custom_call.1} parent=1 // pred_region
      %s28 = ssub.s32 256, 256
      %29 = vsyncadd [#allocation4], %s28
      %s31 = sshll.u32 [#allocation5], 4
      %s32 = int_to_ptr.vmem [resolvable:$true] %s31
      %34 = dma.vmem_to_hbm [thread:$0]  %s32, 256, %s1, [#allocation4]
    $region13: #{tpu_custom_call.1} parent=1 // pred_fallthru
      _
    // Predicated region
    $region14: #{tpu_custom_call.1} parent=1 // pred_check
      _
    $region15: #{tpu_custom_call.1} parent=1 // pred_check_branch
      %36 = sbr.rel (0) target = $region17
    $region16: #{tpu_custom_call.1} parent=1 // pred_region
      %37 = dma.done [#allocation4], 256
    $region17: #{tpu_custom_call.1} parent=1 // pred_fallthru
      _
    %38 = vsyncpa [#allocation3], 1
    %39 = vsyncpa [#allocation4], 1

</llo_original>
